<compile_context>
chip_gen: v5e
topology: v5e:2x2
jax: 0.10.0
libtpu: 0.0.40
codegen_flags: <defaults>
</compile_context>

<pallas_src>
import functools

import jax
import jax.numpy as jnp
from jax.experimental import pallas as pl
from jax.experimental.pallas import tpu as pltpu


def _softplus(x):
    # Matches torch.nn.Softplus(beta=1, threshold=20):
    #   softplus(x) = log(1 + exp(x)) for x <= 20, else x (linear region).
    # Written as exp -> add -> log (2 EUP ops + 1 VALU op) on purpose.
    safe = jnp.minimum(x, jnp.asarray(20.0, dtype=x.dtype))
    return jnp.where(x > 20.0, x, jnp.log(1.0 + jnp.exp(safe)))


def _mlp_kernel(t_ref, x_ref, p1_ref, p2_ref, o_ref, *, compute_dtype):
    # t_ref: [1, TN], x_ref: [S, TN]
    # p1_ref: [H, S+2] = [w1x | w1t | b1]
    # p2_ref: [1, H+1] = [w2_row | b2]
    # o_ref: [1, TN]
    hidden, sp2 = p1_ref.shape
    s = sp2 - 2

    t = t_ref[...]
    x = x_ref[...]

    p1 = p1_ref[...]
    w1x = p1[:, :s]                    # [H, S]
    w1t = p1[:, s:s + 1]               # [H, 1]
    b1 = p1[:, s + 1:s + 2]            # [H, 1]

    p2 = p2_ref[...]
    w2 = p2[:, :hidden]                # [1, H]
    b2 = p2[:, hidden:hidden + 1]      # [1, 1]

    # First Linear: MXU matmul (K = state_dim) for the state features; the
    # torch cat([t, x]) time column is fused as a VPU outer-product add.
    h = jnp.dot(w1x, x, preferred_element_type=jnp.float32)   # [H, TN]
    h = h + w1t * t + b1

    # Optional bf16 elementwise path (v6e/v7x have bf16 VPU/EUP).
    h = _softplus(h.astype(compute_dtype))

    # Second Linear (output width 1) also on the MXU: [1,H] x [H,TN] -> [1,TN].
    y = jnp.dot(w2.astype(h.dtype), h, preferred_element_type=jnp.float32)
    y = y + b2
    o_ref[...] = _softplus(y).astype(o_ref.dtype)


def _round_up(n, m):
    return ((n + m - 1) // m) * m


@functools.partial(jax.jit, static_argnames=("tile_n", "compute_dtype"))
def neural_density_forward_fm(t, x_fm, p1, p2, *, tile_n=16384,
                              compute_dtype=jnp.float32):
    """Core entry point: rho(t, x) with feature-major x.

    t:    [N]              time
    x_fm: [state_dim, N]   state, feature-major (keep it in this layout across
                           calls to avoid any per-call transpose)
    p1:   [H, S+2]         packed [w1x | w1t | b1]
    p2:   [1, H+1]         packed [w2_row | b2]
    returns: [N]           rho(t, x)
    """
    n = t.shape[0]
    state_dim = x_fm.shape[0]

    t_row = t.astype(jnp.float32).reshape(1, n)   # free reshape
    x_fm = x_fm.astype(jnp.float32)

    # Tile selection: lane-axis tiles are multiples of 128, capped at tile_n,
    # and chosen so the "parallel" grid has >=2 steps whenever N allows it
    # (lets v7x's two TensorCores both run; harmless on v5e/v6e).
    n128 = _round_up(max(n, 1), 128)
    half = _round_up(pl.cdiv(n128, 2), 128)
    tile = max(128, min(tile_n, half))
    grid = (pl.cdiv(max(n, 1), tile),)

    resident = lambda i: (0, 0)   # params stay VMEM-resident across the grid

    out = pl.pallas_call(
        functools.partial(_mlp_kernel, compute_dtype=compute_dtype),
        out_shape=jax.ShapeDtypeStruct((1, n), jnp.float32),
        grid=grid,
        in_specs=[
            pl.BlockSpec((1, tile), lambda i: (0, i)),           # t row tile
            pl.BlockSpec((state_dim, tile), lambda i: (0, i)),   # x (feature-major) tile
            pl.BlockSpec(p1.shape, resident),                    # packed layer-1 params
            pl.BlockSpec(p2.shape, resident),                    # packed layer-2 params
        ],
        out_specs=pl.BlockSpec((1, tile), lambda i: (0, i)),     # lane-dense output
        compiler_params=pltpu.CompilerParams(
            dimension_semantics=("parallel",),
            vmem_limit_bytes=32 * 1024 * 1024,
        ),
    )(t_row, x_fm, p1.astype(jnp.float32), p2.astype(jnp.float32))

    # torch .squeeze() drops the trailing size-1 dim -> shape [N]
    return out[0]


def neural_density_forward(t, x, p1, p2, *, tile_n=16384,
                           compute_dtype=jnp.float32):
    """Convenience wrapper taking torch-layout x [N, state_dim].

    For repeated calls (density / ODE loops) keep x feature-major and call
    neural_density_forward_fm directly to avoid this per-call transpose.
    """
    x_fm = x.astype(jnp.float32).T                # [S, N]
    return neural_density_forward_fm(t, x_fm, p1, p2,
                                     tile_n=tile_n, compute_dtype=compute_dtype)


def init_params(key, state_dim, hidden_dim):
    """torch.nn.Linear default init (uniform +-1/sqrt(fan_in)), torch layout:
    w1 [H, 1+S] (time column first, matching cat([t, x])), b1 [H],
    w2 [1, H], b2 [1]."""
    input_dim = state_dim + 1
    k1, k2, k3, k4 = jax.random.split(key, 4)
    bound1 = 1.0 / float(input_dim) ** 0.5
    bound2 = 1.0 / float(hidden_dim) ** 0.5
    w1 = jax.random.uniform(k1, (hidden_dim, input_dim), jnp.float32, -bound1, bound1)
    b1 = jax.random.uniform(k2, (hidden_dim,), jnp.float32, -bound1, bound1)
    w2 = jax.random.uniform(k3, (1, hidden_dim), jnp.float32, -bound2, bound2)
    b2 = jax.random.uniform(k4, (1,), jnp.float32, -bound2, bound2)
    return w1, b1, w2, b2


def pack_params(w1, b1, w2, b2):
    """Pack torch-layout weights into the two resident kernel param blocks."""
    p1 = jnp.concatenate([w1[:, 1:], w1[:, :1], b1[:, None]], axis=1)  # [H, S+2]
    p2 = jnp.concatenate([w2, b2[None, :]], axis=1)                    # [1, H+1]
    return p1, p2


def reference(t, x, w1, b1, w2, b2):
    """Pure-JAX reference of the torch module's forward."""
    inp = jnp.concatenate([t[:, None], x], axis=-1)          # [N, 1+S]
    h = jax.nn.softplus(inp @ w1.T + b1)                     # [N, H]
    y = jax.nn.softplus(h @ w2.T + b2)                       # [N, 1]
    return jnp.squeeze(y, axis=-1)


if __name__ == "__main__":
    state_dim = 4
    hidden_dim = 64   # torch module default
    batch = 8

    key = jax.random.PRNGKey(0)
    kp, kt, kx = jax.random.split(key, 3)

    w1, b1, w2, b2 = init_params(kp, state_dim, hidden_dim)
    p1, p2 = pack_params(w1, b1, w2, b2)

    t = jax.random.uniform(kt, (batch,), jnp.float32)
    x = jax.random.normal(kx, (batch, state_dim), jnp.float32)

    rho = neural_density_forward(t, x, p1, p2)
    jax.block_until_ready(rho)

    ref = reference(t, x, w1, b1, w2, b2)
    assert rho.shape == (batch,)
    assert jnp.allclose(rho, ref, atol=1e-5, rtol=1e-5)

    # Exercise the multi-step grid with a ragged (partially filled) last block.
    n2 = 300
    kt2, kx2 = jax.random.split(jax.random.PRNGKey(1))
    t2 = jax.random.uniform(kt2, (n2,), jnp.float32)
    x2 = jax.random.normal(kx2, (n2, state_dim), jnp.float32)
    rho2 = neural_density_forward(t2, x2, p1, p2, tile_n=128)
    jax.block_until_ready(rho2)
    ref2 = reference(t2, x2, w1, b1, w2, b2)
    assert rho2.shape == (n2,)
    assert jnp.allclose(rho2, ref2, atol=1e-5, rtol=1e-5)

    print("KERNEL_OK")
</pallas_src>

<mosaic_0001>
module attributes {stable_mosaic.version = 11 : i64} {
  func.func @_mlp_kernel(%arg0: i32, %arg1: memref<1x128xf32, #tpu.memory_space<vmem>>, %arg2: memref<4x128xf32, #tpu.memory_space<vmem>>, %arg3: memref<64x6xf32, #tpu.memory_space<vmem>>, %arg4: memref<1x65xf32, #tpu.memory_space<vmem>>, %arg5: memref<1x128xf32, #tpu.memory_space<vmem>>) attributes {dimension_semantics = [#tpu.dimension_semantics<parallel>], iteration_bounds = array<i64: 1>, scalar_prefetch = 0 : i64, scratch_operands = 0 : i64, tpu.core_type = #tpu.core_type<tc>, window_params = [{transform_indices = @transform_0, window_bounds = array<i64: 1, 128>}, {transform_indices = @transform_1, window_bounds = array<i64: 4, 128>}, {pipeline_mode = #tpu.pipeline_mode<synchronous>, transform_indices = @transform_2, window_bounds = array<i64: 64, 6>}, {pipeline_mode = #tpu.pipeline_mode<synchronous>, transform_indices = @transform_3, window_bounds = array<i64: 1, 65>}, {transform_indices = @transform_4, window_bounds = array<i64: 1, 128>}]} {
    %c0 = arith.constant 0 : index
    %c0_0 = arith.constant 0 : index
    %0 = vector.load %arg1[%c0, %c0_0] : memref<1x128xf32, #tpu.memory_space<vmem>>, vector<1x128xf32>
    %c0_1 = arith.constant 0 : index
    %c0_2 = arith.constant 0 : index
    %1 = vector.load %arg2[%c0_1, %c0_2] : memref<4x128xf32, #tpu.memory_space<vmem>>, vector<4x128xf32>
    %c0_3 = arith.constant 0 : index
    %c0_4 = arith.constant 0 : index
    %2 = vector.load %arg3[%c0_3, %c0_4] : memref<64x6xf32, #tpu.memory_space<vmem>>, vector<64x6xf32>
    %3 = vector.extract_strided_slice %2 {offsets = [0, 0], sizes = [64, 4], strides = [1, 1]} : vector<64x6xf32> to vector<64x4xf32>
    %4 = vector.extract_strided_slice %2 {offsets = [0, 4], sizes = [64, 1], strides = [1, 1]} : vector<64x6xf32> to vector<64x1xf32>
    %5 = vector.extract_strided_slice %2 {offsets = [0, 5], sizes = [64, 1], strides = [1, 1]} : vector<64x6xf32> to vector<64x1xf32>
    %c0_5 = arith.constant 0 : index
    %c0_6 = arith.constant 0 : index
    %6 = vector.load %arg4[%c0_5, %c0_6] : memref<1x65xf32, #tpu.memory_space<vmem>>, vector<1x65xf32>
    %7 = vector.extract_strided_slice %6 {offsets = [0, 0], sizes = [1, 64], strides = [1, 1]} : vector<1x65xf32> to vector<1x64xf32>
    %8 = vector.extract_strided_slice %6 {offsets = [0, 64], sizes = [1, 1], strides = [1, 1]} : vector<1x65xf32> to vector<1x1xf32>
    %cst = arith.constant dense<0.000000e+00> : vector<64x128xf32>
    %9 = tpu.matmul %3, %1, %cst {dimension_numbers = #tpu.dot_dimension_numbers<[1], [0], [0], [1], [0, 0, 1, 1], [], []>} : vector<64x4xf32>, vector<4x128xf32>, vector<64x128xf32> -> vector<64x128xf32>
    %10 = vector.broadcast %4 : vector<64x1xf32> to vector<64x128xf32>
    %11 = vector.broadcast %0 : vector<1x128xf32> to vector<64x128xf32>
    %12 = arith.mulf %10, %11 : vector<64x128xf32>
    %13 = arith.addf %9, %12 : vector<64x128xf32>
    %14 = vector.broadcast %5 : vector<64x1xf32> to vector<64x128xf32>
    %15 = arith.addf %13, %14 : vector<64x128xf32>
    %cst_7 = arith.constant 2.000000e+01 : f32
    %16 = vector.broadcast %cst_7 : f32 to vector<64x128xf32>
    %17 = arith.minimumf %15, %16 : vector<64x128xf32>
    %cst_8 = arith.constant 2.000000e+01 : f32
    %18 = vector.broadcast %cst_8 : f32 to vector<64x128xf32>
    %19 = arith.cmpf ogt, %15, %18 : vector<64x128xf32>
    %20 = math.exp %17 : vector<64x128xf32>
    %cst_9 = arith.constant 1.000000e+00 : f32
    %21 = vector.broadcast %cst_9 : f32 to vector<64x128xf32>
    %22 = arith.addf %21, %20 : vector<64x128xf32>
    %23 = math.log %22 : vector<64x128xf32>
    %24 = arith.select %19, %15, %23 : vector<64x128xi1>, vector<64x128xf32>
    %cst_10 = arith.constant dense<0.000000e+00> : vector<1x128xf32>
    %25 = tpu.matmul %7, %24, %cst_10 {dimension_numbers = #tpu.dot_dimension_numbers<[1], [0], [0], [1], [0, 0, 1, 1], [], []>} : vector<1x64xf32>, vector<64x128xf32>, vector<1x128xf32> -> vector<1x128xf32>
    %26 = vector.broadcast %8 : vector<1x1xf32> to vector<1x128xf32>
    %27 = arith.addf %25, %26 : vector<1x128xf32>
    %cst_11 = arith.constant 2.000000e+01 : f32
    %28 = vector.broadcast %cst_11 : f32 to vector<1x128xf32>
    %29 = arith.minimumf %27, %28 : vector<1x128xf32>
    %cst_12 = arith.constant 2.000000e+01 : f32
    %30 = vector.broadcast %cst_12 : f32 to vector<1x128xf32>
    %31 = arith.cmpf ogt, %27, %30 : vector<1x128xf32>
    %32 = math.exp %29 : vector<1x128xf32>
    %cst_13 = arith.constant 1.000000e+00 : f32
    %33 = vector.broadcast %cst_13 : f32 to vector<1x128xf32>
    %34 = arith.addf %33, %32 : vector<1x128xf32>
    %35 = math.log %34 : vector<1x128xf32>
    %36 = arith.select %31, %27, %35 : vector<1x128xi1>, vector<1x128xf32>
    %c0_14 = arith.constant 0 : index
    %c0_15 = arith.constant 0 : index
    %37 = vector.load %arg5[%c0_14, %c0_15] : memref<1x128xf32, #tpu.memory_space<vmem>>, vector<1x128xf32>
    tpu.vector_store %arg5[%c0_14, %c0_15], %36 {strides = array<i32>} : memref<1x128xf32, #tpu.memory_space<vmem>>, vector<1x128xf32>,
    return
  }
  func.func @transform_0(%arg0: i32) -> (i32, i32) {
    %c0_i32 = arith.constant 0 : i32
    %c0_i32_0 = arith.constant 0 : i32
    return %c0_i32, %arg0 : i32, i32
  }
  func.func @transform_1(%arg0: i32) -> (i32, i32) {
    %c0_i32 = arith.constant 0 : i32
    %c0_i32_0 = arith.constant 0 : i32
    return %c0_i32, %arg0 : i32, i32
  }
  func.func @transform_2(%arg0: i32) -> (i32, i32) {
    %c0_i32 = arith.constant 0 : i32
    %c0_i32_0 = arith.constant 0 : i32
    %c0_i32_1 = arith.constant 0 : i32
    return %c0_i32, %c0_i32_0 : i32, i32
  }
  func.func @transform_3(%arg0: i32) -> (i32, i32) {
    %c0_i32 = arith.constant 0 : i32
    %c0_i32_0 = arith.constant 0 : i32
    %c0_i32_1 = arith.constant 0 : i32
    return %c0_i32, %c0_i32_0 : i32, i32
  }
  func.func @transform_4(%arg0: i32) -> (i32, i32) {
    %c0_i32 = arith.constant 0 : i32
    %c0_i32_0 = arith.constant 0 : i32
    return %c0_i32, %arg0 : i32, i32
  }
}

</mosaic_0001>

<llo_original>
// kernel: neural_density_forward_fm.1
$region0: #{neural_density_forward_fm.1}
  #allocation0 [shape = 'u32[]', space=smem, size = 0x4, offset = 0x4, fixed_abs, tag = 'smem constant byte address 0x4 - core index']
  #allocation1 [shape = 'u32[72,128]{1,0:T(1,128)}', space=vmem, size = 0x9000, scoped, tag = 'internal scratch']
  %s0 = inlined_call_operand.vmem [shape: f32[1,8], index: 0, kind: input, shape index: {}]
  %s1 = inlined_call_operand.vmem [shape: f32[4,8], index: 1, kind: input, shape index: {}]
  %s2 = inlined_call_operand.vmem [shape: f32[64,6], index: 2, kind: input, shape index: {}]
  %s3 = inlined_call_operand.vmem [shape: f32[1,65], index: 3, kind: input, shape index: {}]
  %s4 = inlined_call_operand.hbm [shape: f32[1,8], index: 4, kind: output, shape index: {}]
  %s5 = sld [smem:[#allocation0]]
  $region26: #{neural_density_forward_fm.1} parent=0
    _
  %s7 = ssub.s32 1, %s5
  %s8 = scalar_select 0, %s7, %s5
  $region1: #{neural_density_forward_fm.1} parent=0
    #allocation2 [shape = 'u8[512]{0}', space=vmem, size = 0x400, scoped, tag = 'output window, operand 0, single buffered']
    #allocation3 [shape = 's32[1]{0}', space=sflag, size = 0x4, scoped, tag = 'scoped memory for neural_density_forward_fm.1']
    %9 = vsyncpa [#allocation3], 0
    // Predicated region
    $region2: #{neural_density_forward_fm.1} parent=1 // pred_check
      _
    $region3: #{neural_density_forward_fm.1} parent=1 // pred_check_branch
      %11 = sbr.rel (0) target = $region5
    $region4: #{neural_density_forward_fm.1} parent=1 // pred_region
      _
    $region5: #{neural_density_forward_fm.1} parent=1 // pred_fallthru
      _
    // Predicated region
    $region6: #{neural_density_forward_fm.1} parent=1 // pred_check
      _
    $region7: #{neural_density_forward_fm.1} parent=1 // pred_check_branch
      %13 = sbr.rel (0) target = $region9
    $region8: #{neural_density_forward_fm.1} parent=1 // pred_region
      _
    $region9: #{neural_density_forward_fm.1} parent=1 // pred_fallthru
      _
    // Predicated region
    $region10: #{neural_density_forward_fm.1} parent=1 // pred_check
      _
    $region11: #{neural_density_forward_fm.1} parent=1 // pred_check_branch
      %15 = sbr.rel (0) target = $region13
    $region12: #{neural_density_forward_fm.1} parent=1 // pred_region
      _
    $region13: #{neural_density_forward_fm.1} parent=1 // pred_fallthru
      _
    // Predicated region
    $region14: #{neural_density_forward_fm.1} parent=1 // pred_check
      _
    $region15: #{neural_density_forward_fm.1} parent=1 // pred_check_branch
      %17 = sbr.rel (0) target = $region17
    $region16: #{neural_density_forward_fm.1} parent=1 // pred_region
      _
    $region17: #{neural_density_forward_fm.1} parent=1 // pred_fallthru
      _
    %v18 = vld [vmem:[%s0] sm:$0x1]
    %v19 = vld [vmem:[%s1] sm:$0xf]
    %v20 = vld [vmem:[%s2] sm:$0xff]
    %v21 = vld [vmem:[%s2 + $0x8] sm:$0xff]
    %v22 = vld [vmem:[%s2 + $0x10] sm:$0xff]
    %v23 = vld [vmem:[%s2 + $0x18] sm:$0xff]
    %v24 = vld [vmem:[%s2 + $0x20] sm:$0xff]
    %v25 = vld [vmem:[%s2 + $0x28] sm:$0xff]
    %v26 = vld [vmem:[%s2 + $0x30] sm:$0xff]
    %v27 = vld [vmem:[%s2 + $0x38] sm:$0xff]
    %v28 = vld [vmem:[%s3] sm:$0x1]
    %30 = vset.pattern.permute.xlu0 4
    %31 = vperm.xlu0 %30, %v20
    %v32 = vpop.permute.xlu0 %31
    %35 = vset.pattern.permute.xlu0 4
    %36 = vperm.xlu0 %35, %v21
    %v37 = vpop.permute.xlu0 %36
    %40 = vset.pattern.permute.xlu0 4
    %41 = vperm.xlu0 %40, %v22
    %v42 = vpop.permute.xlu0 %41
    %45 = vset.pattern.permute.xlu0 4
    %46 = vperm.xlu0 %45, %v23
    %v47 = vpop.permute.xlu0 %46
    %50 = vset.pattern.permute.xlu0 4
    %51 = vperm.xlu0 %50, %v24
    %v52 = vpop.permute.xlu0 %51
    %55 = vset.pattern.permute.xlu0 4
    %56 = vperm.xlu0 %55, %v25
    %v57 = vpop.permute.xlu0 %56
    %60 = vset.pattern.permute.xlu0 4
    %61 = vperm.xlu0 %60, %v26
    %v62 = vpop.permute.xlu0 %61
    %65 = vset.pattern.permute.xlu0 4
    %66 = vperm.xlu0 %65, %v27
    %v67 = vpop.permute.xlu0 %66
    %v70 = vperm.slane %v18, 0
    %v72 = vmul.f32 %v32, %v70
    %v73 = vmul.f32 %v37, %v70
    %v74 = vmul.f32 %v42, %v70
    %v75 = vmul.f32 %v47, %v70
    %v76 = vmul.f32 %v52, %v70
    %v77 = vmul.f32 %v57, %v70
    %v78 = vmul.f32 %v62, %v70
    %v79 = vmul.f32 %v67, %v70
    %vm80 = vcmask 31744
    %v81 = vsel %vm80, %v20, 0
    %v83 = vsel %vm80, %v21, 0
    %v85 = vsel %vm80, %v22, 0
    %v87 = vsel %vm80, %v23, 0
    %v89 = vsel %vm80, %v24, 0
    %v91 = vsel %vm80, %v25, 0
    %v93 = vsel %vm80, %v26, 0
    %v95 = vsel %vm80, %v27, 0
    %vm97 = vcmask 1043456
    %v99 = vsel %vm97, %v19, 0
    %101 = vmatpush.msra.mxu0 0.0
    %102 = vmatpush.msra.mxu0 0.0
    %103 = vmatpush.msra.mxu0 0.0
    %104 = vmatpush.msra.mxu0 0.0
    %105 = vmatpush.msra.mxu0 0.0
    %106 = vmatpush.msra.mxu0 0.0
    %107 = vmatpush.msra.mxu0 0.0
    %108 = vmatpush.msra.mxu0 0.0
    %109 = vmatpush.msra.mxu0 0.0
    %110 = vmatpush.msra.mxu0 0.0
    %111 = vmatpush.msra.mxu0 0.0
    %112 = vmatpush.msra.mxu0 0.0
    %113 = vmatpush.msra.mxu0 0.0
    %114 = vmatpush.msra.mxu0 0.0
    %115 = vmatpush.msra.mxu0 0.0
    %116 = vmatpush.msra.mxu0 %v99
    %117 = vmatmul.f32.gmra.mxu0 %v81
    %v118 = vpop.f32.mrf.mxu0
    %v119 = vadd.f32 %v72, %v118
    %120 = vmatmul.f32.gmra.mxu0 %v83
    %v121 = vpop.f32.mrf.mxu0
    %v122 = vadd.f32 %v73, %v121
    %123 = vmatmul.f32.gmra.mxu0 %v85
    %v124 = vpop.f32.mrf.mxu0
    %v125 = vadd.f32 %v74, %v124
    %126 = vmatmul.f32.gmra.mxu0 %v87
    %v127 = vpop.f32.mrf.mxu0
    %v128 = vadd.f32 %v75, %v127
    %129 = vmatmul.f32.gmra.mxu0 %v89
    %v130 = vpop.f32.mrf.mxu0
    %v131 = vadd.f32 %v76, %v130
    %132 = vmatmul.f32.gmra.mxu0 %v91
    %v133 = vpop.f32.mrf.mxu0
    %v134 = vadd.f32 %v77, %v133
    %135 = vmatmul.f32.gmra.mxu0 %v93
    %v136 = vpop.f32.mrf.mxu0
    %v137 = vadd.f32 %v78, %v136
    %138 = vmatmul.f32.gmra.mxu0 %v95
    %v139 = vpop.f32.mrf.mxu0
    %v140 = vadd.f32 %v79, %v139
    %141 = vdwg.mxu0
    %142 = vset.pattern.permute.xlu0 5
    %143 = vperm.xlu0 %142, %v20
    %v144 = vpop.permute.xlu0 %143
    %146 = vset.pattern.permute.xlu0 5
    %147 = vperm.xlu0 %146, %v21
    %v148 = vpop.permute.xlu0 %147
    %150 = vset.pattern.permute.xlu0 5
    %151 = vperm.xlu0 %150, %v22
    %v152 = vpop.permute.xlu0 %151
    %154 = vset.pattern.permute.xlu0 5
    %155 = vperm.xlu0 %154, %v23
    %v156 = vpop.permute.xlu0 %155
    %158 = vset.pattern.permute.xlu0 5
    %159 = vperm.xlu0 %158, %v24
    %v160 = vpop.permute.xlu0 %159
    %162 = vset.pattern.permute.xlu0 5
    %163 = vperm.xlu0 %162, %v25
    %v164 = vpop.permute.xlu0 %163
    %166 = vset.pattern.permute.xlu0 5
    %167 = vperm.xlu0 %166, %v26
    %v168 = vpop.permute.xlu0 %167
    %170 = vset.pattern.permute.xlu0 5
    %171 = vperm.xlu0 %170, %v27
    %v172 = vpop.permute.xlu0 %171
    %v174 = vadd.f32 %v119, %v144
    %v175 = vadd.f32 %v122, %v148
    %v176 = vadd.f32 %v125, %v152
    %v177 = vadd.f32 %v128, %v156
    %v178 = vadd.f32 %v131, %v160
    %v179 = vadd.f32 %v134, %v164
    %v180 = vadd.f32 %v137, %v168
    %v181 = vadd.f32 %v140, %v172
    %v182 = vmin.f32 %v174, 20.0
    %v183 = vmin.f32 %v175, 20.0
    %v184 = vmin.f32 %v176, 20.0
    %v185 = vmin.f32 %v177, 20.0
    %v186 = vmin.f32 %v178, 20.0
    %v187 = vmin.f32 %v179, 20.0
    %v188 = vmin.f32 %v180, 20.0
    %v189 = vmin.f32 %v181, 20.0
    %vm190 = vcmp.gt.f32.partialorder %v174, 20.0
    %vm191 = vcmp.gt.f32.partialorder %v175, 20.0
    %vm192 = vcmp.gt.f32.partialorder %v176, 20.0
    %vm193 = vcmp.gt.f32.partialorder %v177, 20.0
    %vm194 = vcmp.gt.f32.partialorder %v178, 20.0
    %vm195 = vcmp.gt.f32.partialorder %v179, 20.0
    %vm196 = vcmp.gt.f32.partialorder %v180, 20.0
    %vm197 = vcmp.gt.f32.partialorder %v181, 20.0
    %v198 = vmul.f32 %v182, 1.442695
    %v199 = vpow.pop %v198
    %v200 = vmul.f32 %v183, 1.442695
    %v201 = vpow.pop %v200
    %v202 = vmul.f32 %v184, 1.442695
    %v203 = vpow.pop %v202
    %v204 = vmul.f32 %v185, 1.442695
    %v205 = vpow.pop %v204
    %v206 = vmul.f32 %v186, 1.442695
    %v207 = vpow.pop %v206
    %v208 = vmul.f32 %v187, 1.442695
    %v209 = vpow.pop %v208
    %v210 = vmul.f32 %v188, 1.442695
    %v211 = vpow.pop %v210
    %v212 = vmul.f32 %v189, 1.442695
    %v213 = vpow.pop %v212
    %v214 = vadd.f32 %v199, 1.0
    %v215 = vadd.f32 %v201, 1.0
    %v216 = vadd.f32 %v203, 1.0
    %v217 = vadd.f32 %v205, 1.0
    %v218 = vadd.f32 %v207, 1.0
    %v219 = vadd.f32 %v209, 1.0
    %v220 = vadd.f32 %v211, 1.0
    %v221 = vadd.f32 %v213, 1.0
    %v222 = vlog2.pop %v214
    %v223 = vmul.f32 %v222, 0.6931472
    %v224 = vlog2.pop %v215
    %v225 = vmul.f32 %v224, 0.6931472
    %v226 = vlog2.pop %v216
    %v227 = vmul.f32 %v226, 0.6931472
    %v228 = vlog2.pop %v217
    %v229 = vmul.f32 %v228, 0.6931472
    %v230 = vlog2.pop %v218
    %v231 = vmul.f32 %v230, 0.6931472
    %v232 = vlog2.pop %v219
    %v233 = vmul.f32 %v232, 0.6931472
    %v234 = vlog2.pop %v220
    %v235 = vmul.f32 %v234, 0.6931472
    %v236 = vlog2.pop %v221
    %v237 = vmul.f32 %v236, 0.6931472
    %v238 = vsel %vm190, %v174, %v223
    %v239 = vsel %vm191, %v175, %v225
    %v240 = vsel %vm192, %v176, %v227
    %v241 = vsel %vm193, %v177, %v229
    %v242 = vsel %vm194, %v178, %v231
    %v243 = vsel %vm195, %v179, %v233
    %v244 = vsel %vm196, %v180, %v235
    %v245 = vsel %vm197, %v181, %v237
    %247 = vset.pattern.permute.xlu0 64
    %248 = vperm.xlu0 %247, %v28
    %v249 = vpop.permute.xlu0 %248
    %v251 = vperm.slane %v249, 0
    %vm252 = vcmask 523264
    %v253 = vsel %vm252, %v28, 0
    %255 = vmatpush.msra.mxu0 0.0
    %256 = vmatpush.msra.mxu0 0.0
    %257 = vmatpush.msra.mxu0 0.0
    %258 = vmatpush.msra.mxu0 0.0
    %259 = vmatpush.msra.mxu0 0.0
    %260 = vmatpush.msra.mxu0 0.0
    %261 = vmatpush.msra.mxu0 0.0
    %262 = vmatpush.msra.mxu0 0.0
    %263 = vmatpush.msra.mxu0 %v245
    %264 = vmatpush.msra.mxu0 %v244
    %265 = vmatpush.msra.mxu0 %v243
    %266 = vmatpush.msra.mxu0 %v242
    %267 = vmatpush.msra.mxu0 %v241
    %268 = vmatpush.msra.mxu0 %v240
    %269 = vmatpush.msra.mxu0 %v239
    %270 = vmatpush.msra.mxu0 %v238
    %271 = vmatmul.f32.gmra.mxu0 %v253
    %v272 = vpop.f32.mrf.mxu0
    %v273 = vadd.f32 %v251, %v272
    %274 = vdwg.mxu0
    %v275 = vmin.f32 %v273, 20.0
    %vm276 = vcmp.gt.f32.partialorder %v273, 20.0
    %v277 = vmul.f32 %v275, 1.442695
    %v278 = vpow.pop %v277
    %v279 = vadd.f32 %v278, 1.0
    %v280 = vlog2.pop %v279
    %v281 = vmul.f32 %v280, 0.6931472
    %v282 = vsel %vm276, %v273, %v281
    %283 = vst [vmem:[#allocation2] sm:$0x1] %v282
    // Predicated region
    $region18: #{neural_density_forward_fm.1} parent=1 // pred_check
      _
    $region19: #{neural_density_forward_fm.1} parent=1 // pred_check_branch
      %285 = sbr.rel (0) target = $region21
    $region20: #{neural_density_forward_fm.1} parent=1 // pred_region
      %287 = vsyncadd [#allocation3], 0
      %s289 = sshll.u32 [#allocation2], 4
      %s290 = int_to_ptr.vmem [resolvable:$true] %s289
      %s291 = sshll.u32 %s4, 4
      %s292 = int_to_ptr.hbm [resolvable:$true] %s291
      %294 = dma.vmem_to_hbm [thread:$0]  %s290, 16, %s292, [#allocation3]
    $region21: #{neural_density_forward_fm.1} parent=1 // pred_fallthru
      _
    // Predicated region
    $region22: #{neural_density_forward_fm.1} parent=1 // pred_check
      _
    $region23: #{neural_density_forward_fm.1} parent=1 // pred_check_branch
      %296 = sbr.rel (0) target = $region25
    $region24: #{neural_density_forward_fm.1} parent=1 // pred_region
      %298 = dma.done [#allocation3], 16
    $region25: #{neural_density_forward_fm.1} parent=1 // pred_fallthru
      _
    %299 = vsyncpa [#allocation3], 1

</llo_original>
